<compile_context>
chip_gen: v5e
topology: v5e:2x2
jax: 0.10.0
libtpu: 0.0.40
codegen_flags: <defaults>
</compile_context>

<pallas_src>
from math import sqrt

import jax
import jax.numpy as jnp
from jax.experimental import pallas as pl
from jax.experimental.pallas import tpu as pltpu

INPUT_SIZE = 32
OUTPUT_SIZE = 8
H1, H2, H3 = 256, 128, 64
OUT_PAD = 128          # lane-dense padded output width


def _round_up(x, m):
    return ((x + m - 1) // m) * m


def _choose_batch_tile(b_pad, cap=1024):
    """Pick a batch tile that (a) divides b_pad, (b) is a multiple of 128,
    (c) is as large as possible up to `cap`, and (d) leaves >= 2 grid steps
    whenever b_pad >= 256 so v7x megacore can shard the parallel batch axis
    across both TensorCores (harmless on single-TC v5e/v6e)."""
    m = b_pad // 128
    best = 1
    for d in range(1, m + 1):
        if m % d:
            continue
        tile = 128 * d
        steps = m // d
        if tile > cap:
            continue
        if m >= 2 and steps < 2:
            continue
        best = max(best, d)
    return 128 * best


def mlp_kernel(x_ref,
               w1_ref, b1_ref,
               w2_ref, b2_ref,
               w3_ref, b3_ref,
               w4_ref, b4_ref,
               o_ref):
    x = x_ref[...]                       # bf16 (batch_tile, 32)

    # Hoist bias reads once per invocation (f32, broadcast over rows).
    b1 = b1_ref[...]
    b2 = b2_ref[...]
    b3 = b3_ref[...]
    b4 = b4_ref[...]

    # Layer 1: Linear(32, 256) + ReLU      (Dropout = identity in eval)
    h = jnp.dot(x, w1_ref[...], preferred_element_type=jnp.float32) + b1
    h = jnp.maximum(h, 0.0).astype(jnp.bfloat16)

    # Layer 2: Linear(256, 128) + ReLU
    h = jnp.dot(h, w2_ref[...], preferred_element_type=jnp.float32) + b2
    h = jnp.maximum(h, 0.0).astype(jnp.bfloat16)

    # Layer 3: Linear(128, 64) + ReLU      (Dropout = identity in eval)
    h = jnp.dot(h, w3_ref[...], preferred_element_type=jnp.float32) + b3
    h = jnp.maximum(h, 0.0).astype(jnp.bfloat16)

    # Layer 4: Linear(64, 128-padded) — f32 accumulate, bf16 lane-dense store.
    y = jnp.dot(h, w4_ref[...], preferred_element_type=jnp.float32) + b4
    o_ref[...] = y.astype(o_ref.dtype)


def mlp_forward(x, params, *, batch_tile=None):
    B, D = x.shape
    assert D == INPUT_SIZE

    (w1, b1), (w2, b2), (w3, b3), (w4, b4) = params

    # --- Pad batch only to the 128-row MXU/sublane alignment minimum.
    B_pad = _round_up(B, 128)
    if batch_tile is None:
        batch_tile = _choose_batch_tile(B_pad)
    assert B_pad % batch_tile == 0 and batch_tile % 128 == 0

    # --- Prepare operands: bf16 matmul inputs, f32 biases, lane-dense padded output.
    if B_pad != B:
        x = jnp.pad(x, ((0, B_pad - B), (0, 0)))
    x_bf = x.astype(jnp.bfloat16)

    w1b = w1.astype(jnp.bfloat16)
    w2b = w2.astype(jnp.bfloat16)
    w3b = w3.astype(jnp.bfloat16)
    # Zero-pad last layer to 128 output columns -> unmasked lane-dense stores.
    w4p = jnp.pad(w4, ((0, 0), (0, OUT_PAD - w4.shape[1]))).astype(jnp.bfloat16)
    b4p = jnp.pad(b4, ((0, 0), (0, OUT_PAD - b4.shape[1]))).astype(jnp.float32)
    b1f = b1.astype(jnp.float32)
    b2f = b2.astype(jnp.float32)
    b3f = b3.astype(jnp.float32)

    grid = (B_pad // batch_tile,)

    def full2(_i):
        return (0, 0)

    in_specs = [
        pl.BlockSpec((batch_tile, D), lambda i: (i, 0)),              # x (tiled over batch)
        pl.BlockSpec(w1b.shape, full2), pl.BlockSpec(b1f.shape, full2),
        pl.BlockSpec(w2b.shape, full2), pl.BlockSpec(b2f.shape, full2),
        pl.BlockSpec(w3b.shape, full2), pl.BlockSpec(b3f.shape, full2),
        pl.BlockSpec(w4p.shape, full2), pl.BlockSpec(b4p.shape, full2),
    ]
    out_specs = pl.BlockSpec((batch_tile, OUT_PAD), lambda i: (i, 0))

    flops = 2 * B_pad * (D * H1 + H1 * H2 + H2 * H3 + H3 * OUT_PAD)
    bytes_accessed = (
        x_bf.size * 2
        + (w1b.size + w2b.size + w3b.size + w4p.size) * 2
        + (b1f.size + b2f.size + b3f.size + b4p.size) * 4
        + B_pad * OUT_PAD * 2                       # bf16 output slab
    )

    out = pl.pallas_call(
        mlp_kernel,
        out_shape=jax.ShapeDtypeStruct((B_pad, OUT_PAD), jnp.bfloat16),
        grid_spec=pltpu.PrefetchScalarGridSpec(
            num_scalar_prefetch=0,
            grid=grid,
            in_specs=in_specs,
            out_specs=out_specs,
        ),
        compiler_params=pltpu.CompilerParams(
            dimension_semantics=("parallel",)),
        cost_estimate=pl.CostEstimate(
            flops=flops, transcendentals=0, bytes_accessed=bytes_accessed),
    )(x_bf, w1b, b1f, w2b, b2f, w3b, b3f, w4p, b4p)

    # Restore public shape: un-pad batch, slice true output columns, f32 like
    # the PyTorch module. Tiny (B, 8) op; fuses into downstream consumers.
    return out[:B, :OUTPUT_SIZE].astype(jnp.float32)


def init_linear(key, fan_in, fan_out):
    """Deterministic init mimicking PyTorch nn.Linear defaults:
    U(-1/sqrt(fan_in), 1/sqrt(fan_in)) for both weight and bias.
    Weight is stored as (fan_in, fan_out) = W_torch.T."""
    kw, kb = jax.random.split(key)
    bound = 1.0 / sqrt(fan_in)
    w = jax.random.uniform(kw, (fan_in, fan_out), jnp.float32, -bound, bound)
    b = jax.random.uniform(kb, (1, fan_out), jnp.float32, -bound, bound)
    return w, b


def make_params(key):
    k1, k2, k3, k4 = jax.random.split(key, 4)
    return (
        init_linear(k1, INPUT_SIZE, H1),
        init_linear(k2, H1, H2),
        init_linear(k3, H2, H3),
        init_linear(k4, H3, OUTPUT_SIZE),
    )


def mlp_reference(x, params):
    """Reference with the same bf16-operand / f32-accumulate numerics as the kernel."""
    (w1, b1), (w2, b2), (w3, b3), (w4, b4) = params

    def lin(h, w, b):
        return jnp.dot(h.astype(jnp.bfloat16), w.astype(jnp.bfloat16),
                       preferred_element_type=jnp.float32) + b

    h = jnp.maximum(lin(x, w1, b1), 0.0)
    h = jnp.maximum(lin(h, w2, b2), 0.0)
    h = jnp.maximum(lin(h, w3, b3), 0.0)
    return lin(h, w4, b4)


if __name__ == "__main__":
    key = jax.random.PRNGKey(0)
    kx, kp = jax.random.split(key)

    B = 16
    x = jax.random.normal(kx, (B, INPUT_SIZE), jnp.float32)
    params = make_params(kp)

    out = mlp_forward(x, params)
    out = jax.block_until_ready(out)

    ref = mlp_reference(x, params)
    assert out.shape == (B, OUTPUT_SIZE)
    # bf16 final store adds a little rounding vs the f32-stored reference.
    assert jnp.allclose(out, ref, atol=3e-2, rtol=3e-2), \
        f"max abs err {jnp.max(jnp.abs(out - ref))}"

    print("KERNEL_OK")
</pallas_src>

<mosaic_0001>
module attributes {stable_mosaic.version = 11 : i64} {
  func.func @mlp_kernel(%arg0: i32, %arg1: memref<128x32xbf16, #tpu.memory_space<vmem>>, %arg2: memref<32x256xbf16, #tpu.memory_space<vmem>>, %arg3: memref<1x256xf32, #tpu.memory_space<vmem>>, %arg4: memref<256x128xbf16, #tpu.memory_space<vmem>>, %arg5: memref<1x128xf32, #tpu.memory_space<vmem>>, %arg6: memref<128x64xbf16, #tpu.memory_space<vmem>>, %arg7: memref<1x64xf32, #tpu.memory_space<vmem>>, %arg8: memref<64x128xbf16, #tpu.memory_space<vmem>>, %arg9: memref<1x128xf32, #tpu.memory_space<vmem>>, %arg10: memref<128x128xbf16, #tpu.memory_space<vmem>>) attributes {dimension_semantics = [#tpu.dimension_semantics<parallel>], iteration_bounds = array<i64: 1>, scalar_prefetch = 0 : i64, scratch_operands = 0 : i64, tpu.core_type = #tpu.core_type<tc>, window_params = [{transform_indices = @transform_0, window_bounds = array<i64: 128, 32>}, {pipeline_mode = #tpu.pipeline_mode<synchronous>, transform_indices = @transform_1, window_bounds = array<i64: 32, 256>}, {pipeline_mode = #tpu.pipeline_mode<synchronous>, transform_indices = @transform_2, window_bounds = array<i64: 1, 256>}, {pipeline_mode = #tpu.pipeline_mode<synchronous>, transform_indices = @transform_3, window_bounds = array<i64: 256, 128>}, {pipeline_mode = #tpu.pipeline_mode<synchronous>, transform_indices = @transform_4, window_bounds = array<i64: 1, 128>}, {pipeline_mode = #tpu.pipeline_mode<synchronous>, transform_indices = @transform_5, window_bounds = array<i64: 128, 64>}, {pipeline_mode = #tpu.pipeline_mode<synchronous>, transform_indices = @transform_6, window_bounds = array<i64: 1, 64>}, {pipeline_mode = #tpu.pipeline_mode<synchronous>, transform_indices = @transform_7, window_bounds = array<i64: 64, 128>}, {pipeline_mode = #tpu.pipeline_mode<synchronous>, transform_indices = @transform_8, window_bounds = array<i64: 1, 128>}, {transform_indices = @transform_9, window_bounds = array<i64: 128, 128>}]} {
    %c0 = arith.constant 0 : index
    %c0_0 = arith.constant 0 : index
    %0 = vector.load %arg1[%c0, %c0_0] : memref<128x32xbf16, #tpu.memory_space<vmem>>, vector<128x32xbf16>
    %c0_1 = arith.constant 0 : index
    %c0_2 = arith.constant 0 : index
    %1 = vector.load %arg3[%c0_1, %c0_2] : memref<1x256xf32, #tpu.memory_space<vmem>>, vector<1x256xf32>
    %c0_3 = arith.constant 0 : index
    %c0_4 = arith.constant 0 : index
    %2 = vector.load %arg5[%c0_3, %c0_4] : memref<1x128xf32, #tpu.memory_space<vmem>>, vector<1x128xf32>
    %c0_5 = arith.constant 0 : index
    %c0_6 = arith.constant 0 : index
    %3 = vector.load %arg7[%c0_5, %c0_6] : memref<1x64xf32, #tpu.memory_space<vmem>>, vector<1x64xf32>
    %c0_7 = arith.constant 0 : index
    %c0_8 = arith.constant 0 : index
    %4 = vector.load %arg9[%c0_7, %c0_8] : memref<1x128xf32, #tpu.memory_space<vmem>>, vector<1x128xf32>
    %c0_9 = arith.constant 0 : index
    %c0_10 = arith.constant 0 : index
    %5 = vector.load %arg2[%c0_9, %c0_10] : memref<32x256xbf16, #tpu.memory_space<vmem>>, vector<32x256xbf16>
    %cst = arith.constant dense<0.000000e+00> : vector<128x256xf32>
    %6 = tpu.matmul %0, %5, %cst {dimension_numbers = #tpu.dot_dimension_numbers<[1], [0], [0], [1], [0, 0, 1, 1], [], []>} : vector<128x32xbf16>, vector<32x256xbf16>, vector<128x256xf32> -> vector<128x256xf32>
    %7 = vector.broadcast %1 : vector<1x256xf32> to vector<128x256xf32>
    %8 = arith.addf %6, %7 : vector<128x256xf32>
    %cst_11 = arith.constant 0.000000e+00 : f32
    %9 = vector.broadcast %cst_11 : f32 to vector<128x256xf32>
    %10 = arith.maximumf %8, %9 : vector<128x256xf32>
    %11 = arith.truncf %10 : vector<128x256xf32> to vector<128x256xbf16>
    %c0_12 = arith.constant 0 : index
    %c0_13 = arith.constant 0 : index
    %12 = vector.load %arg4[%c0_12, %c0_13] : memref<256x128xbf16, #tpu.memory_space<vmem>>, vector<256x128xbf16>
    %cst_14 = arith.constant dense<0.000000e+00> : vector<128x128xf32>
    %13 = tpu.matmul %11, %12, %cst_14 {dimension_numbers = #tpu.dot_dimension_numbers<[1], [0], [0], [1], [0, 0, 1, 1], [], []>} : vector<128x256xbf16>, vector<256x128xbf16>, vector<128x128xf32> -> vector<128x128xf32>
    %14 = vector.broadcast %2 : vector<1x128xf32> to vector<128x128xf32>
    %15 = arith.addf %13, %14 : vector<128x128xf32>
    %cst_15 = arith.constant 0.000000e+00 : f32
    %16 = vector.broadcast %cst_15 : f32 to vector<128x128xf32>
    %17 = arith.maximumf %15, %16 : vector<128x128xf32>
    %18 = arith.truncf %17 : vector<128x128xf32> to vector<128x128xbf16>
    %c0_16 = arith.constant 0 : index
    %c0_17 = arith.constant 0 : index
    %19 = vector.load %arg6[%c0_16, %c0_17] : memref<128x64xbf16, #tpu.memory_space<vmem>>, vector<128x64xbf16>
    %cst_18 = arith.constant dense<0.000000e+00> : vector<128x64xf32>
    %20 = tpu.matmul %18, %19, %cst_18 {dimension_numbers = #tpu.dot_dimension_numbers<[1], [0], [0], [1], [0, 0, 1, 1], [], []>} : vector<128x128xbf16>, vector<128x64xbf16>, vector<128x64xf32> -> vector<128x64xf32>
    %21 = vector.broadcast %3 : vector<1x64xf32> to vector<128x64xf32>
    %22 = arith.addf %20, %21 : vector<128x64xf32>
    %cst_19 = arith.constant 0.000000e+00 : f32
    %23 = vector.broadcast %cst_19 : f32 to vector<128x64xf32>
    %24 = arith.maximumf %22, %23 : vector<128x64xf32>
    %25 = arith.truncf %24 : vector<128x64xf32> to vector<128x64xbf16>
    %c0_20 = arith.constant 0 : index
    %c0_21 = arith.constant 0 : index
    %26 = vector.load %arg8[%c0_20, %c0_21] : memref<64x128xbf16, #tpu.memory_space<vmem>>, vector<64x128xbf16>
    %cst_22 = arith.constant dense<0.000000e+00> : vector<128x128xf32>
    %27 = tpu.matmul %25, %26, %cst_22 {dimension_numbers = #tpu.dot_dimension_numbers<[1], [0], [0], [1], [0, 0, 1, 1], [], []>} : vector<128x64xbf16>, vector<64x128xbf16>, vector<128x128xf32> -> vector<128x128xf32>
    %28 = vector.broadcast %4 : vector<1x128xf32> to vector<128x128xf32>
    %29 = arith.addf %27, %28 : vector<128x128xf32>
    %30 = arith.truncf %29 : vector<128x128xf32> to vector<128x128xbf16>
    %c0_23 = arith.constant 0 : index
    %c0_24 = arith.constant 0 : index
    %31 = vector.load %arg10[%c0_23, %c0_24] : memref<128x128xbf16, #tpu.memory_space<vmem>>, vector<128x128xbf16>
    tpu.vector_store %arg10[%c0_23, %c0_24], %30 {strides = array<i32>} : memref<128x128xbf16, #tpu.memory_space<vmem>>, vector<128x128xbf16>,
    return
  }
  func.func @transform_0(%arg0: i32) -> (i32, i32) {
    %c0_i32 = arith.constant 0 : i32
    %c0_i32_0 = arith.constant 0 : i32
    return %arg0, %c0_i32 : i32, i32
  }
  func.func @transform_1(%arg0: i32) -> (i32, i32) {
    %c0_i32 = arith.constant 0 : i32
    %c0_i32_0 = arith.constant 0 : i32
    %c0_i32_1 = arith.constant 0 : i32
    return %c0_i32, %c0_i32_0 : i32, i32
  }
  func.func @transform_2(%arg0: i32) -> (i32, i32) {
    %c0_i32 = arith.constant 0 : i32
    %c0_i32_0 = arith.constant 0 : i32
    %c0_i32_1 = arith.constant 0 : i32
    return %c0_i32, %c0_i32_0 : i32, i32
  }
  func.func @transform_3(%arg0: i32) -> (i32, i32) {
    %c0_i32 = arith.constant 0 : i32
    %c0_i32_0 = arith.constant 0 : i32
    %c0_i32_1 = arith.constant 0 : i32
    return %c0_i32, %c0_i32_0 : i32, i32
  }
  func.func @transform_4(%arg0: i32) -> (i32, i32) {
    %c0_i32 = arith.constant 0 : i32
    %c0_i32_0 = arith.constant 0 : i32
    %c0_i32_1 = arith.constant 0 : i32
    return %c0_i32, %c0_i32_0 : i32, i32
  }
  func.func @transform_5(%arg0: i32) -> (i32, i32) {
    %c0_i32 = arith.constant 0 : i32
    %c0_i32_0 = arith.constant 0 : i32
    %c0_i32_1 = arith.constant 0 : i32
    return %c0_i32, %c0_i32_0 : i32, i32
  }
  func.func @transform_6(%arg0: i32) -> (i32, i32) {
    %c0_i32 = arith.constant 0 : i32
    %c0_i32_0 = arith.constant 0 : i32
    %c0_i32_1 = arith.constant 0 : i32
    return %c0_i32, %c0_i32_0 : i32, i32
  }
  func.func @transform_7(%arg0: i32) -> (i32, i32) {
    %c0_i32 = arith.constant 0 : i32
    %c0_i32_0 = arith.constant 0 : i32
    %c0_i32_1 = arith.constant 0 : i32
    return %c0_i32, %c0_i32_0 : i32, i32
  }
  func.func @transform_8(%arg0: i32) -> (i32, i32) {
    %c0_i32 = arith.constant 0 : i32
    %c0_i32_0 = arith.constant 0 : i32
    %c0_i32_1 = arith.constant 0 : i32
    return %c0_i32, %c0_i32_0 : i32, i32
  }
  func.func @transform_9(%arg0: i32) -> (i32, i32) {
    %c0_i32 = arith.constant 0 : i32
    %c0_i32_0 = arith.constant 0 : i32
    return %arg0, %c0_i32 : i32, i32
  }
}

</mosaic_0001>

<llo_original>
// kernel: tpu_custom_call.1
$region0: #{tpu_custom_call.1}
  #allocation0 [shape = 'u32[]', space=smem, size = 0x4, offset = 0x4, fixed_abs, tag = 'smem constant byte address 0x4 - core index']
  #allocation1 [shape = 'u32[72,128]{1,0:T(1,128)}', space=vmem, size = 0x9000, scoped, tag = 'internal scratch']
  %s0 = inlined_call_operand.vmem [shape: bf16[128,32], index: 0, kind: input, shape index: {}]
  %s1 = inlined_call_operand.vmem [shape: bf16[32,256], index: 1, kind: input, shape index: {}]
  %s2 = inlined_call_operand.vmem [shape: f32[1,256], index: 2, kind: input, shape index: {}]
  %s3 = inlined_call_operand.vmem [shape: bf16[256,128], index: 3, kind: input, shape index: {}]
  %s4 = inlined_call_operand.vmem [shape: f32[1,128], index: 4, kind: input, shape index: {}]
  %s5 = inlined_call_operand.vmem [shape: bf16[128,64], index: 5, kind: input, shape index: {}]
  %s6 = inlined_call_operand.vmem [shape: f32[1,64], index: 6, kind: input, shape index: {}]
  %s7 = inlined_call_operand.hbm [shape: bf16[64,128], index: 7, kind: input, shape index: {}]
  %s8 = inlined_call_operand.vmem [shape: f32[1,128], index: 8, kind: input, shape index: {}]
  %s9 = inlined_call_operand.hbm [shape: bf16[128,128], index: 9, kind: output, shape index: {}]
  %s10 = sld [smem:[#allocation0]]
  $region50: #{tpu_custom_call.1} parent=0
    _
  %s12 = ssub.s32 1, %s10
  %s13 = scalar_select 0, %s12, %s10
  $region1: #{tpu_custom_call.1} parent=0
    #allocation2 [shape = 'u8[16384]{0}', space=vmem, size = 0x4000, scoped, tag = 'input window, operand 7, single buffered']
    #allocation3 [shape = 's32[1]{0}', space=sflag, size = 0x4, scoped, tag = 'scoped memory for tpu_custom_call.1']
    #allocation4 [shape = 's32[1]{0}', space=sflag, size = 0x4, scoped, tag = 'scoped memory for tpu_custom_call.1']
    #allocation5 [shape = 'u8[32768]{0}', space=vmem, size = 0x8000, scoped, tag = 'output window, operand 0, single buffered']
    %14 = vsyncpa [#allocation3], 0
    %15 = vsyncpa [#allocation4], 0
    // Predicated region
    $region2: #{tpu_custom_call.1} parent=1 // pred_check
      _
    $region3: #{tpu_custom_call.1} parent=1 // pred_check_branch
      %17 = sbr.rel (0) target = $region5
    $region4: #{tpu_custom_call.1} parent=1 // pred_region
      _
    $region5: #{tpu_custom_call.1} parent=1 // pred_fallthru
      _
    // Predicated region
    $region6: #{tpu_custom_call.1} parent=1 // pred_check
      _
    $region7: #{tpu_custom_call.1} parent=1 // pred_check_branch
      %19 = sbr.rel (0) target = $region9
    $region8: #{tpu_custom_call.1} parent=1 // pred_region
      _
    $region9: #{tpu_custom_call.1} parent=1 // pred_fallthru
      _
    // Predicated region
    $region10: #{tpu_custom_call.1} parent=1 // pred_check
      _
    $region11: #{tpu_custom_call.1} parent=1 // pred_check_branch
      %21 = sbr.rel (0) target = $region13
    $region12: #{tpu_custom_call.1} parent=1 // pred_region
      _
    $region13: #{tpu_custom_call.1} parent=1 // pred_fallthru
      _
    // Predicated region
    $region14: #{tpu_custom_call.1} parent=1 // pred_check
      _
    $region15: #{tpu_custom_call.1} parent=1 // pred_check_branch
      %23 = sbr.rel (0) target = $region17
    $region16: #{tpu_custom_call.1} parent=1 // pred_region
      _
    $region17: #{tpu_custom_call.1} parent=1 // pred_fallthru
      _
    // Predicated region
    $region18: #{tpu_custom_call.1} parent=1 // pred_check
      _
    $region19: #{tpu_custom_call.1} parent=1 // pred_check_branch
      %25 = sbr.rel (0) target = $region21
    $region20: #{tpu_custom_call.1} parent=1 // pred_region
      _
    $region21: #{tpu_custom_call.1} parent=1 // pred_fallthru
      _
    // Predicated region
    $region22: #{tpu_custom_call.1} parent=1 // pred_check
      _
    $region23: #{tpu_custom_call.1} parent=1 // pred_check_branch
      %27 = sbr.rel (0) target = $region25
    $region24: #{tpu_custom_call.1} parent=1 // pred_region
      _
    $region25: #{tpu_custom_call.1} parent=1 // pred_fallthru
      _
    // Predicated region
    $region26: #{tpu_custom_call.1} parent=1 // pred_check
      _
    $region27: #{tpu_custom_call.1} parent=1 // pred_check_branch
      %29 = sbr.rel (0) target = $region29
    $region28: #{tpu_custom_call.1} parent=1 // pred_region
      _
    $region29: #{tpu_custom_call.1} parent=1 // pred_fallthru
      _
    // Predicated region
    $region30: #{tpu_custom_call.1} parent=1 // pred_check
      _
    $region31: #{tpu_custom_call.1} parent=1 // pred_check_branch
      %31 = sbr.rel (0) target = $region33
    $region32: #{tpu_custom_call.1} parent=1 // pred_region
      %33 = vsyncadd [#allocation3], 0
      %s34 = sshll.u32 %s7, 4
      %s35 = int_to_ptr.hbm [resolvable:$true] %s34
      %s36 = sshll.u32 [#allocation2], 4
      %s37 = int_to_ptr.vmem [resolvable:$true] %s36
      %42 = dma.hbm_to_vmem [thread:$0]  %s35, 512, %s37, [#allocation3], 64, 64, 4
    $region33: #{tpu_custom_call.1} parent=1 // pred_fallthru
      _
    // Predicated region
    $region34: #{tpu_custom_call.1} parent=1 // pred_check
      _
    $region35: #{tpu_custom_call.1} parent=1 // pred_check_branch
      %44 = sbr.rel (0) target = $region37
    $region36: #{tpu_custom_call.1} parent=1 // pred_region
      _
    $region37: #{tpu_custom_call.1} parent=1 // pred_fallthru
      _
    // Predicated region
    $region38: #{tpu_custom_call.1} parent=1 // pred_check
      _
    $region39: #{tpu_custom_call.1} parent=1 // pred_check_branch
      %46 = sbr.rel (0) target = $region41
    $region40: #{tpu_custom_call.1} parent=1 // pred_region
      %48 = dma.done [#allocation3], 512
    $region41: #{tpu_custom_call.1} parent=1 // pred_fallthru
      _
    %v50 = vld [vmem:[%s0] sm:$0xf]
    %v51 = vld [vmem:[%s0 + $0x4] sm:$0xf]
    %v52 = vld [vmem:[%s0 + $0x8] sm:$0xf]
    %v53 = vld [vmem:[%s0 + $0xc] sm:$0xf]
    %v54 = vld [vmem:[%s0 + $0x10] sm:$0xf]
    %v55 = vld [vmem:[%s0 + $0x14] sm:$0xf]
    %v56 = vld [vmem:[%s0 + $0x18] sm:$0xf]
    %v57 = vld [vmem:[%s0 + $0x1c] sm:$0xf]
    %v58 = vld [vmem:[%s0 + $0x20] sm:$0xf]
    %v59 = vld [vmem:[%s0 + $0x24] sm:$0xf]
    %v60 = vld [vmem:[%s0 + $0x28] sm:$0xf]
    %v61 = vld [vmem:[%s0 + $0x2c] sm:$0xf]
    %v62 = vld [vmem:[%s0 + $0x30] sm:$0xf]
    %v63 = vld [vmem:[%s0 + $0x34] sm:$0xf]
    %v64 = vld [vmem:[%s0 + $0x38] sm:$0xf]
    %v65 = vld [vmem:[%s0 + $0x3c] sm:$0xf]
    %v66 = vld [vmem:[%s2] sm:$0x3]
    %v67 = vld [vmem:[%s4] sm:$0x1]
    %v68 = vld [vmem:[%s6] sm:$0x1]
    %v69 = vld [vmem:[%s8] sm:$0x1]
    %v70 = vld [vmem:[%s1] sm:$0xff]
    %v71 = vld [vmem:[%s1 + $0x8] sm:$0xff]
    %v72 = vld [vmem:[%s1 + $0x10] sm:$0xff]
    %v73 = vld [vmem:[%s1 + $0x18] sm:$0xff]
    %v75 = vperm.slane %v66, 0
    %v76 = vperm.slane %v66, 1
    %v95 = vunpack.c.l.b16 %v50
    %v96 = vunpack.c.l.b16 %v51
    %v97 = vunpack.c.l.b16 %v52
    %v98 = vunpack.c.l.b16 %v53
    %v99 = vunpack.c.l.b16 %v54
    %v100 = vunpack.c.l.b16 %v55
    %v101 = vunpack.c.l.b16 %v56
    %v102 = vunpack.c.l.b16 %v57
    %v103 = vunpack.c.l.b16 %v58
    %v104 = vunpack.c.l.b16 %v59
    %v105 = vunpack.c.l.b16 %v60
    %v106 = vunpack.c.l.b16 %v61
    %v107 = vunpack.c.l.b16 %v62
    %v108 = vunpack.c.l.b16 %v63
    %v109 = vunpack.c.l.b16 %v64
    %v110 = vunpack.c.l.b16 %v65
    %v111 = vpack.c.b16 %v96, %v95
    %v112 = vpack.c.b16 %v98, %v97
    %v113 = vpack.c.b16 %v100, %v99
    %v114 = vpack.c.b16 %v102, %v101
    %v115 = vpack.c.b16 %v104, %v103
    %v116 = vpack.c.b16 %v106, %v105
    %v117 = vpack.c.b16 %v108, %v107
    %v118 = vpack.c.b16 %v110, %v109
    %v123 = vunpack.c.l.b16 %v70
    %v124 = vunpack.c.h.b16 %v70
    %v125 = vunpack.c.l.b16 %v71
    %v126 = vunpack.c.h.b16 %v71
    %v127 = vunpack.c.l.b16 %v72
    %v128 = vunpack.c.h.b16 %v72
    %v129 = vunpack.c.l.b16 %v73
    %v130 = vunpack.c.h.b16 %v73
    %v131 = vpack.c.b16 %v125, %v123
    %v132 = vpack.c.b16 %v126, %v124
    %v133 = vpack.c.b16 %v129, %v127
    %v134 = vpack.c.b16 %v130, %v128
    %vm139 = vcmask 261120
    %v141 = vsel %vm139, %v111, 0
    %v144 = vsel %vm139, %v112, 0
    %v147 = vsel %vm139, %v113, 0
    %v150 = vsel %vm139, %v114, 0
    %v153 = vsel %vm139, %v115, 0
    %v156 = vsel %vm139, %v116, 0
    %v159 = vsel %vm139, %v117, 0
    %v162 = vsel %vm139, %v118, 0
    %164 = vmatpush.bf16.msra.mxu0 0
    %165 = vmatpush.bf16.msra.mxu0 0
    %166 = vmatpush.bf16.msra.mxu0 0
    %167 = vmatpush.bf16.msra.mxu0 0
    %168 = vmatpush.bf16.msra.mxu0 0
    %169 = vmatpush.bf16.msra.mxu0 0
    %170 = vmatpush.bf16.msra.mxu0 %v133
    %171 = vmatpush.bf16.msra.mxu0 %v131
    %172 = vmatmul.bf16.gmra.mxu0 %v141
    %v173 = vpop.f32.mrf.mxu0
    %v174 = vadd.f32 %v75, %v173
    %v175 = vpop.f32.mrf.mxu0
    %v176 = vadd.f32 %v75, %v175
    %177 = vmatmul.bf16.gmra.mxu0 %v144
    %v178 = vpop.f32.mrf.mxu0
    %v179 = vadd.f32 %v75, %v178
    %v180 = vpop.f32.mrf.mxu0
    %v181 = vadd.f32 %v75, %v180
    %182 = vmatmul.bf16.gmra.mxu0 %v147
    %v183 = vpop.f32.mrf.mxu0
    %v184 = vadd.f32 %v75, %v183
    %v185 = vpop.f32.mrf.mxu0
    %v186 = vadd.f32 %v75, %v185
    %187 = vmatmul.bf16.gmra.mxu0 %v150
    %v188 = vpop.f32.mrf.mxu0
    %v189 = vadd.f32 %v75, %v188
    %v190 = vpop.f32.mrf.mxu0
    %v191 = vadd.f32 %v75, %v190
    %192 = vmatmul.bf16.gmra.mxu0 %v153
    %v193 = vpop.f32.mrf.mxu0
    %v194 = vadd.f32 %v75, %v193
    %v195 = vpop.f32.mrf.mxu0
    %v196 = vadd.f32 %v75, %v195
    %197 = vmatmul.bf16.gmra.mxu0 %v156
    %v198 = vpop.f32.mrf.mxu0
    %v199 = vadd.f32 %v75, %v198
    %v200 = vpop.f32.mrf.mxu0
    %v201 = vadd.f32 %v75, %v200
    %202 = vmatmul.bf16.gmra.mxu0 %v159
    %v203 = vpop.f32.mrf.mxu0
    %v204 = vadd.f32 %v75, %v203
    %v205 = vpop.f32.mrf.mxu0
    %v206 = vadd.f32 %v75, %v205
    %207 = vmatmul.bf16.gmra.mxu0 %v162
    %v208 = vpop.f32.mrf.mxu0
    %v209 = vadd.f32 %v75, %v208
    %v210 = vpop.f32.mrf.mxu0
    %v211 = vadd.f32 %v75, %v210
    %212 = vdwg.mxu0
    %213 = vmatpush.bf16.msra.mxu0 0
    %214 = vmatpush.bf16.msra.mxu0 0
    %215 = vmatpush.bf16.msra.mxu0 0
    %216 = vmatpush.bf16.msra.mxu0 0
    %217 = vmatpush.bf16.msra.mxu0 0
    %218 = vmatpush.bf16.msra.mxu0 0
    %219 = vmatpush.bf16.msra.mxu0 %v134
    %220 = vmatpush.bf16.msra.mxu0 %v132
    %221 = vmatmul.bf16.gmra.mxu0 %v141
    %v222 = vpop.f32.mrf.mxu0
    %v223 = vadd.f32 %v76, %v222
    %v224 = vpop.f32.mrf.mxu0
    %v225 = vadd.f32 %v76, %v224
    %226 = vmatmul.bf16.gmra.mxu0 %v144
    %v227 = vpop.f32.mrf.mxu0
    %v228 = vadd.f32 %v76, %v227
    %v229 = vpop.f32.mrf.mxu0
    %v230 = vadd.f32 %v76, %v229
    %231 = vmatmul.bf16.gmra.mxu0 %v147
    %v232 = vpop.f32.mrf.mxu0
    %v233 = vadd.f32 %v76, %v232
    %v234 = vpop.f32.mrf.mxu0
    %v235 = vadd.f32 %v76, %v234
    %236 = vmatmul.bf16.gmra.mxu0 %v150
    %v237 = vpop.f32.mrf.mxu0
    %v238 = vadd.f32 %v76, %v237
    %v239 = vpop.f32.mrf.mxu0
    %v240 = vadd.f32 %v76, %v239
    %241 = vmatmul.bf16.gmra.mxu0 %v153
    %v242 = vpop.f32.mrf.mxu0
    %v243 = vadd.f32 %v76, %v242
    %v244 = vpop.f32.mrf.mxu0
    %v245 = vadd.f32 %v76, %v244
    %246 = vmatmul.bf16.gmra.mxu0 %v156
    %v247 = vpop.f32.mrf.mxu0
    %v248 = vadd.f32 %v76, %v247
    %v249 = vpop.f32.mrf.mxu0
    %v250 = vadd.f32 %v76, %v249
    %251 = vmatmul.bf16.gmra.mxu0 %v159
    %v252 = vpop.f32.mrf.mxu0
    %v253 = vadd.f32 %v76, %v252
    %v254 = vpop.f32.mrf.mxu0
    %v255 = vadd.f32 %v76, %v254
    %256 = vmatmul.bf16.gmra.mxu0 %v162
    %v257 = vpop.f32.mrf.mxu0
    %v258 = vadd.f32 %v76, %v257
    %v259 = vpop.f32.mrf.mxu0
    %v260 = vadd.f32 %v76, %v259
    %261 = vdwg.mxu0
    %v262 = vmax.f32 %v174, 0.0
    %v263 = vmax.f32 %v223, 0.0
    %v264 = vmax.f32 %v176, 0.0
    %v265 = vmax.f32 %v225, 0.0
    %v266 = vmax.f32 %v179, 0.0
    %v267 = vmax.f32 %v228, 0.0
    %v268 = vmax.f32 %v181, 0.0
    %v269 = vmax.f32 %v230, 0.0
    %v270 = vmax.f32 %v184, 0.0
    %v271 = vmax.f32 %v233, 0.0
    %v272 = vmax.f32 %v186, 0.0
    %v273 = vmax.f32 %v235, 0.0
    %v274 = vmax.f32 %v189, 0.0
    %v275 = vmax.f32 %v238, 0.0
    %v276 = vmax.f32 %v191, 0.0
    %v277 = vmax.f32 %v240, 0.0
    %v278 = vmax.f32 %v194, 0.0
    %v279 = vmax.f32 %v243, 0.0
    %v280 = vmax.f32 %v196, 0.0
    %v281 = vmax.f32 %v245, 0.0
    %v282 = vmax.f32 %v199, 0.0
    %v283 = vmax.f32 %v248, 0.0
    %v284 = vmax.f32 %v201, 0.0
    %v285 = vmax.f32 %v250, 0.0
    %v286 = vmax.f32 %v204, 0.0
    %v287 = vmax.f32 %v253, 0.0
    %v288 = vmax.f32 %v206, 0.0
    %v289 = vmax.f32 %v255, 0.0
    %v290 = vmax.f32 %v209, 0.0
    %v291 = vmax.f32 %v258, 0.0
    %v292 = vmax.f32 %v211, 0.0
    %v293 = vmax.f32 %v260, 0.0
    %v294 = vpack.c.bf16 %v264, %v262
    %v295 = vpack.c.bf16 %v265, %v263
    %v296 = vpack.c.bf16 %v268, %v266
    %v297 = vpack.c.bf16 %v269, %v267
    %v298 = vpack.c.bf16 %v272, %v270
    %v299 = vpack.c.bf16 %v273, %v271
    %v300 = vpack.c.bf16 %v276, %v274
    %v301 = vpack.c.bf16 %v277, %v275
    %v302 = vpack.c.bf16 %v280, %v278
    %v303 = vpack.c.bf16 %v281, %v279
    %v304 = vpack.c.bf16 %v284, %v282
    %v305 = vpack.c.bf16 %v285, %v283
    %v306 = vpack.c.bf16 %v288, %v286
    %v307 = vpack.c.bf16 %v289, %v287
    %v308 = vpack.c.bf16 %v292, %v290
    %v309 = vpack.c.bf16 %v293, %v291
    %v310 = vld [vmem:[%s3] sm:$0xf]
    %v311 = vld [vmem:[%s3 + $0x4] sm:$0xf]
    %v312 = vld [vmem:[%s3 + $0x8] sm:$0xf]
    %v313 = vld [vmem:[%s3 + $0xc] sm:$0xf]
    %v314 = vld [vmem:[%s3 + $0x10] sm:$0xf]
    %v315 = vld [vmem:[%s3 + $0x14] sm:$0xf]
    %v316 = vld [vmem:[%s3 + $0x18] sm:$0xf]
    %v317 = vld [vmem:[%s3 + $0x1c] sm:$0xf]
    %v318 = vld [vmem:[%s3 + $0x20] sm:$0xf]
    %v319 = vld [vmem:[%s3 + $0x24] sm:$0xf]
    %v320 = vld [vmem:[%s3 + $0x28] sm:$0xf]
    %v321 = vld [vmem:[%s3 + $0x2c] sm:$0xf]
    %v322 = vld [vmem:[%s3 + $0x30] sm:$0xf]
    %v323 = vld [vmem:[%s3 + $0x34] sm:$0xf]
    %v324 = vld [vmem:[%s3 + $0x38] sm:$0xf]
    %v325 = vld [vmem:[%s3 + $0x3c] sm:$0xf]
    %v326 = vld [vmem:[%s3 + $0x40] sm:$0xf]
    %v327 = vld [vmem:[%s3 + $0x44] sm:$0xf]
    %v328 = vld [vmem:[%s3 + $0x48] sm:$0xf]
    %v329 = vld [vmem:[%s3 + $0x4c] sm:$0xf]
    %v330 = vld [vmem:[%s3 + $0x50] sm:$0xf]
    %v331 = vld [vmem:[%s3 + $0x54] sm:$0xf]
    %v332 = vld [vmem:[%s3 + $0x58] sm:$0xf]
    %v333 = vld [vmem:[%s3 + $0x5c] sm:$0xf]
    %v334 = vld [vmem:[%s3 + $0x60] sm:$0xf]
    %v335 = vld [vmem:[%s3 + $0x64] sm:$0xf]
    %v336 = vld [vmem:[%s3 + $0x68] sm:$0xf]
    %v337 = vld [vmem:[%s3 + $0x6c] sm:$0xf]
    %v338 = vld [vmem:[%s3 + $0x70] sm:$0xf]
    %v339 = vld [vmem:[%s3 + $0x74] sm:$0xf]
    %v340 = vld [vmem:[%s3 + $0x78] sm:$0xf]
    %v341 = vld [vmem:[%s3 + $0x7c] sm:$0xf]
    %v343 = vperm.slane %v67, 0
    %v377 = vunpack.c.l.b16 %v310
    %v378 = vunpack.c.l.b16 %v311
    %v379 = vunpack.c.l.b16 %v312
    %v380 = vunpack.c.l.b16 %v313
    %v381 = vunpack.c.l.b16 %v314
    %v382 = vunpack.c.l.b16 %v315
    %v383 = vunpack.c.l.b16 %v316
    %v384 = vunpack.c.l.b16 %v317
    %v385 = vunpack.c.l.b16 %v318
    %v386 = vunpack.c.l.b16 %v319
    %v387 = vunpack.c.l.b16 %v320
    %v388 = vunpack.c.l.b16 %v321
    %v389 = vunpack.c.l.b16 %v322
    %v390 = vunpack.c.l.b16 %v323
    %v391 = vunpack.c.l.b16 %v324
    %v392 = vunpack.c.l.b16 %v325
    %v393 = vunpack.c.l.b16 %v326
    %v394 = vunpack.c.l.b16 %v327
    %v395 = vunpack.c.l.b16 %v328
    %v396 = vunpack.c.l.b16 %v329
    %v397 = vunpack.c.l.b16 %v330
    %v398 = vunpack.c.l.b16 %v331
    %v399 = vunpack.c.l.b16 %v332
    %v400 = vunpack.c.l.b16 %v333
    %v401 = vunpack.c.l.b16 %v334
    %v402 = vunpack.c.l.b16 %v335
    %v403 = vunpack.c.l.b16 %v336
    %v404 = vunpack.c.l.b16 %v337
    %v405 = vunpack.c.l.b16 %v338
    %v406 = vunpack.c.l.b16 %v339
    %v407 = vunpack.c.l.b16 %v340
    %v408 = vunpack.c.l.b16 %v341
    %v409 = vpack.c.b16 %v378, %v377
    %v410 = vpack.c.b16 %v380, %v379
    %v411 = vpack.c.b16 %v382, %v381
    %v412 = vpack.c.b16 %v384, %v383
    %v413 = vpack.c.b16 %v386, %v385
    %v414 = vpack.c.b16 %v388, %v387
    %v415 = vpack.c.b16 %v390, %v389
    %v416 = vpack.c.b16 %v392, %v391
    %v417 = vpack.c.b16 %v394, %v393
    %v418 = vpack.c.b16 %v396, %v395
    %v419 = vpack.c.b16 %v398, %v397
    %v420 = vpack.c.b16 %v400, %v399
    %v421 = vpack.c.b16 %v402, %v401
    %v422 = vpack.c.b16 %v404, %v403
    %v423 = vpack.c.b16 %v406, %v405
    %v424 = vpack.c.b16 %v408, %v407
    %441 = vmatpush.bf16.msra.mxu0 %v416
    %442 = vmatpush.bf16.msra.mxu0 %v415
    %443 = vmatpush.bf16.msra.mxu0 %v414
    %444 = vmatpush.bf16.msra.mxu0 %v413
    %445 = vmatpush.bf16.msra.mxu0 %v412
    %446 = vmatpush.bf16.msra.mxu0 %v411
    %447 = vmatpush.bf16.msra.mxu0 %v410
    %448 = vmatpush.bf16.msra.mxu0 %v409
    %449 = vmatmul.bf16.gmra.mxu0 %v294
    %v450 = vpop.f32.mrf.mxu0
    %v451 = vadd.f32 %v343, %v450
    %v452 = vpop.f32.mrf.mxu0
    %v453 = vadd.f32 %v343, %v452
    %454 = vmatmul.bf16.gmra.mxu0 %v296
    %v455 = vpop.f32.mrf.mxu0
    %v456 = vadd.f32 %v343, %v455
    %v457 = vpop.f32.mrf.mxu0
    %v458 = vadd.f32 %v343, %v457
    %459 = vmatmul.bf16.gmra.mxu0 %v298
    %v460 = vpop.f32.mrf.mxu0
    %v461 = vadd.f32 %v343, %v460
    %v462 = vpop.f32.mrf.mxu0
    %v463 = vadd.f32 %v343, %v462
    %464 = vmatmul.bf16.gmra.mxu0 %v300
    %v465 = vpop.f32.mrf.mxu0
    %v466 = vadd.f32 %v343, %v465
    %v467 = vpop.f32.mrf.mxu0
    %v468 = vadd.f32 %v343, %v467
    %469 = vmatmul.bf16.gmra.mxu0 %v302
    %v470 = vpop.f32.mrf.mxu0
    %v471 = vadd.f32 %v343, %v470
    %v472 = vpop.f32.mrf.mxu0
    %v473 = vadd.f32 %v343, %v472
    %474 = vmatmul.bf16.gmra.mxu0 %v304
    %v475 = vpop.f32.mrf.mxu0
    %v476 = vadd.f32 %v343, %v475
    %v477 = vpop.f32.mrf.mxu0
    %v478 = vadd.f32 %v343, %v477
    %479 = vmatmul.bf16.gmra.mxu0 %v306
    %v480 = vpop.f32.mrf.mxu0
    %v481 = vadd.f32 %v343, %v480
    %v482 = vpop.f32.mrf.mxu0
    %v483 = vadd.f32 %v343, %v482
    %484 = vmatmul.bf16.gmra.mxu0 %v308
    %v485 = vpop.f32.mrf.mxu0
    %v486 = vadd.f32 %v343, %v485
    %v487 = vpop.f32.mrf.mxu0
    %v488 = vadd.f32 %v343, %v487
    %489 = vdwg.mxu0
    %490 = vmatpush.bf16.msra.mxu0 %v424
    %491 = vmatpush.bf16.msra.mxu0 %v423
    %492 = vmatpush.bf16.msra.mxu0 %v422
    %493 = vmatpush.bf16.msra.mxu0 %v421
    %494 = vmatpush.bf16.msra.mxu0 %v420
    %495 = vmatpush.bf16.msra.mxu0 %v419
    %496 = vmatpush.bf16.msra.mxu0 %v418
    %497 = vmatpush.bf16.msra.mxu0 %v417
    %498 = vmatmul.bf16.gmra.mxu0 %v295
    %v499 = vpop.f32.mrf.mxu0
    %v500 = vadd.f32 %v451, %v499
    %v501 = vpop.f32.mrf.mxu0
    %v502 = vadd.f32 %v453, %v501
    %503 = vmatmul.bf16.gmra.mxu0 %v297
    %v504 = vpop.f32.mrf.mxu0
    %v505 = vadd.f32 %v456, %v504
    %v506 = vpop.f32.mrf.mxu0
    %v507 = vadd.f32 %v458, %v506
    %508 = vmatmul.bf16.gmra.mxu0 %v299
    %v509 = vpop.f32.mrf.mxu0
    %v510 = vadd.f32 %v461, %v509
    %v511 = vpop.f32.mrf.mxu0
    %v512 = vadd.f32 %v463, %v511
    %513 = vmatmul.bf16.gmra.mxu0 %v301
    %v514 = vpop.f32.mrf.mxu0
    %v515 = vadd.f32 %v466, %v514
    %v516 = vpop.f32.mrf.mxu0
    %v517 = vadd.f32 %v468, %v516
    %518 = vmatmul.bf16.gmra.mxu0 %v303
    %v519 = vpop.f32.mrf.mxu0
    %v520 = vadd.f32 %v471, %v519
    %v521 = vpop.f32.mrf.mxu0
    %v522 = vadd.f32 %v473, %v521
    %523 = vmatmul.bf16.gmra.mxu0 %v305
    %v524 = vpop.f32.mrf.mxu0
    %v525 = vadd.f32 %v476, %v524
    %v526 = vpop.f32.mrf.mxu0
    %v527 = vadd.f32 %v478, %v526
    %528 = vmatmul.bf16.gmra.mxu0 %v307
    %v529 = vpop.f32.mrf.mxu0
    %v530 = vadd.f32 %v481, %v529
    %v531 = vpop.f32.mrf.mxu0
    %v532 = vadd.f32 %v483, %v531
    %533 = vmatmul.bf16.gmra.mxu0 %v309
    %v534 = vpop.f32.mrf.mxu0
    %v535 = vadd.f32 %v486, %v534
    %v536 = vpop.f32.mrf.mxu0
    %v537 = vadd.f32 %v488, %v536
    %538 = vdwg.mxu0
    %v539 = vmax.f32 %v500, 0.0
    %v540 = vmax.f32 %v502, 0.0
    %v541 = vmax.f32 %v505, 0.0
    %v542 = vmax.f32 %v507, 0.0
    %v543 = vmax.f32 %v510, 0.0
    %v544 = vmax.f32 %v512, 0.0
    %v545 = vmax.f32 %v515, 0.0
    %v546 = vmax.f32 %v517, 0.0
    %v547 = vmax.f32 %v520, 0.0
    %v548 = vmax.f32 %v522, 0.0
    %v549 = vmax.f32 %v525, 0.0
    %v550 = vmax.f32 %v527, 0.0
    %v551 = vmax.f32 %v530, 0.0
    %v552 = vmax.f32 %v532, 0.0
    %v553 = vmax.f32 %v535, 0.0
    %v554 = vmax.f32 %v537, 0.0
    %v555 = vpack.c.bf16 %v540, %v539
    %v556 = vpack.c.bf16 %v542, %v541
    %v557 = vpack.c.bf16 %v544, %v543
    %v558 = vpack.c.bf16 %v546, %v545
    %v559 = vpack.c.bf16 %v548, %v547
    %v560 = vpack.c.bf16 %v550, %v549
    %v561 = vpack.c.bf16 %v552, %v551
    %v562 = vpack.c.bf16 %v554, %v553
    %v563 = vld [vmem:[%s5] sm:$0xf]
    %v564 = vld [vmem:[%s5 + $0x4] sm:$0xf]
    %v565 = vld [vmem:[%s5 + $0x8] sm:$0xf]
    %v566 = vld [vmem:[%s5 + $0xc] sm:$0xf]
    %v567 = vld [vmem:[%s5 + $0x10] sm:$0xf]
    %v568 = vld [vmem:[%s5 + $0x14] sm:$0xf]
    %v569 = vld [vmem:[%s5 + $0x18] sm:$0xf]
    %v570 = vld [vmem:[%s5 + $0x1c] sm:$0xf]
    %v571 = vld [vmem:[%s5 + $0x20] sm:$0xf]
    %v572 = vld [vmem:[%s5 + $0x24] sm:$0xf]
    %v573 = vld [vmem:[%s5 + $0x28] sm:$0xf]
    %v574 = vld [vmem:[%s5 + $0x2c] sm:$0xf]
    %v575 = vld [vmem:[%s5 + $0x30] sm:$0xf]
    %v576 = vld [vmem:[%s5 + $0x34] sm:$0xf]
    %v577 = vld [vmem:[%s5 + $0x38] sm:$0xf]
    %v578 = vld [vmem:[%s5 + $0x3c] sm:$0xf]
    %v580 = vperm.slane %v68, 0
    %v598 = vunpack.c.l.b16 %v563
    %v599 = vunpack.c.l.b16 %v564
    %v600 = vunpack.c.l.b16 %v565
    %v601 = vunpack.c.l.b16 %v566
    %v602 = vunpack.c.l.b16 %v567
    %v603 = vunpack.c.l.b16 %v568
    %v604 = vunpack.c.l.b16 %v569
    %v605 = vunpack.c.l.b16 %v570
    %v606 = vunpack.c.l.b16 %v571
    %v607 = vunpack.c.l.b16 %v572
    %v608 = vunpack.c.l.b16 %v573
    %v609 = vunpack.c.l.b16 %v574
    %v610 = vunpack.c.l.b16 %v575
    %v611 = vunpack.c.l.b16 %v576
    %v612 = vunpack.c.l.b16 %v577
    %v613 = vunpack.c.l.b16 %v578
    %v614 = vpack.c.b16 %v599, %v598
    %v615 = vpack.c.b16 %v601, %v600
    %v616 = vpack.c.b16 %v603, %v602
    %v617 = vpack.c.b16 %v605, %v604
    %v618 = vpack.c.b16 %v607, %v606
    %v619 = vpack.c.b16 %v609, %v608
    %v620 = vpack.c.b16 %v611, %v610
    %v621 = vpack.c.b16 %v613, %v612
    %630 = vmatpush.bf16.msra.mxu0 %v621
    %631 = vmatpush.bf16.msra.mxu0 %v620
    %632 = vmatpush.bf16.msra.mxu0 %v619
    %633 = vmatpush.bf16.msra.mxu0 %v618
    %634 = vmatpush.bf16.msra.mxu0 %v617
    %635 = vmatpush.bf16.msra.mxu0 %v616
    %636 = vmatpush.bf16.msra.mxu0 %v615
    %637 = vmatpush.bf16.msra.mxu0 %v614
    %638 = vmatmul.bf16.gmra.mxu0 %v555
    %v639 = vpop.f32.mrf.mxu0
    %v640 = vadd.f32 %v580, %v639
    %v641 = vpop.f32.mrf.mxu0
    %v642 = vadd.f32 %v580, %v641
    %643 = vmatmul.bf16.gmra.mxu0 %v556
    %v644 = vpop.f32.mrf.mxu0
    %v645 = vadd.f32 %v580, %v644
    %v646 = vpop.f32.mrf.mxu0
    %v647 = vadd.f32 %v580, %v646
    %648 = vmatmul.bf16.gmra.mxu0 %v557
    %v649 = vpop.f32.mrf.mxu0
    %v650 = vadd.f32 %v580, %v649
    %v651 = vpop.f32.mrf.mxu0
    %v652 = vadd.f32 %v580, %v651
    %653 = vmatmul.bf16.gmra.mxu0 %v558
    %v654 = vpop.f32.mrf.mxu0
    %v655 = vadd.f32 %v580, %v654
    %v656 = vpop.f32.mrf.mxu0
    %v657 = vadd.f32 %v580, %v656
    %658 = vmatmul.bf16.gmra.mxu0 %v559
    %v659 = vpop.f32.mrf.mxu0
    %v660 = vadd.f32 %v580, %v659
    %v661 = vpop.f32.mrf.mxu0
    %v662 = vadd.f32 %v580, %v661
    %663 = vmatmul.bf16.gmra.mxu0 %v560
    %v664 = vpop.f32.mrf.mxu0
    %v665 = vadd.f32 %v580, %v664
    %v666 = vpop.f32.mrf.mxu0
    %v667 = vadd.f32 %v580, %v666
    %668 = vmatmul.bf16.gmra.mxu0 %v561
    %v669 = vpop.f32.mrf.mxu0
    %v670 = vadd.f32 %v580, %v669
    %v671 = vpop.f32.mrf.mxu0
    %v672 = vadd.f32 %v580, %v671
    %673 = vmatmul.bf16.gmra.mxu0 %v562
    %v674 = vpop.f32.mrf.mxu0
    %v675 = vadd.f32 %v580, %v674
    %v676 = vpop.f32.mrf.mxu0
    %v677 = vadd.f32 %v580, %v676
    %678 = vdwg.mxu0
    %v679 = vmax.f32 %v640, 0.0
    %v680 = vmax.f32 %v642, 0.0
    %v681 = vmax.f32 %v645, 0.0
    %v682 = vmax.f32 %v647, 0.0
    %v683 = vmax.f32 %v650, 0.0
    %v684 = vmax.f32 %v652, 0.0
    %v685 = vmax.f32 %v655, 0.0
    %v686 = vmax.f32 %v657, 0.0
    %v687 = vmax.f32 %v660, 0.0
    %v688 = vmax.f32 %v662, 0.0
    %v689 = vmax.f32 %v665, 0.0
    %v690 = vmax.f32 %v667, 0.0
    %v691 = vmax.f32 %v670, 0.0
    %v692 = vmax.f32 %v672, 0.0
    %v693 = vmax.f32 %v675, 0.0
    %v694 = vmax.f32 %v677, 0.0
    %v695 = vpack.c.bf16 %v680, %v679
    %v696 = vpack.c.bf16 %v682, %v681
    %v697 = vpack.c.bf16 %v684, %v683
    %v698 = vpack.c.bf16 %v686, %v685
    %v699 = vpack.c.bf16 %v688, %v687
    %v700 = vpack.c.bf16 %v690, %v689
    %v701 = vpack.c.bf16 %v692, %v691
    %v702 = vpack.c.bf16 %v694, %v693
    %v703 = vld [vmem:[#allocation2] sm:$0xf]
    %v704 = vld [vmem:[#allocation2 + $0x4] sm:$0xf]
    %v705 = vld [vmem:[#allocation2 + $0x8] sm:$0xf]
    %v706 = vld [vmem:[#allocation2 + $0xc] sm:$0xf]
    %v707 = vld [vmem:[#allocation2 + $0x10] sm:$0xf]
    %v708 = vld [vmem:[#allocation2 + $0x14] sm:$0xf]
    %v709 = vld [vmem:[#allocation2 + $0x18] sm:$0xf]
    %v710 = vld [vmem:[#allocation2 + $0x1c] sm:$0xf]
    %v712 = vperm.slane %v69, 0
    %v722 = vunpack.c.l.b16 %v703
    %v723 = vunpack.c.l.b16 %v704
    %v724 = vunpack.c.l.b16 %v705
    %v725 = vunpack.c.l.b16 %v706
    %v726 = vunpack.c.l.b16 %v707
    %v727 = vunpack.c.l.b16 %v708
    %v728 = vunpack.c.l.b16 %v709
    %v729 = vunpack.c.l.b16 %v710
    %v730 = vpack.c.b16 %v723, %v722
    %v731 = vpack.c.b16 %v725, %v724
    %v732 = vpack.c.b16 %v727, %v726
    %v733 = vpack.c.b16 %v729, %v728
    %vm738 = vcmask 523264
    %v740 = vsel %vm738, %v695, 0
    %v743 = vsel %vm738, %v696, 0
    %v746 = vsel %vm738, %v697, 0
    %v749 = vsel %vm738, %v698, 0
    %v752 = vsel %vm738, %v699, 0
    %v755 = vsel %vm738, %v700, 0
    %v758 = vsel %vm738, %v701, 0
    %v761 = vsel %vm738, %v702, 0
    %763 = vmatpush.bf16.msra.mxu0 0
    %764 = vmatpush.bf16.msra.mxu0 0
    %765 = vmatpush.bf16.msra.mxu0 0
    %766 = vmatpush.bf16.msra.mxu0 0
    %767 = vmatpush.bf16.msra.mxu0 %v733
    %768 = vmatpush.bf16.msra.mxu0 %v732
    %769 = vmatpush.bf16.msra.mxu0 %v731
    %770 = vmatpush.bf16.msra.mxu0 %v730
    %771 = vmatmul.bf16.gmra.mxu0 %v740
    %v772 = vpop.f32.mrf.mxu0
    %v773 = vadd.f32 %v712, %v772
    %v774 = vpop.f32.mrf.mxu0
    %v775 = vadd.f32 %v712, %v774
    %776 = vmatmul.bf16.gmra.mxu0 %v743
    %v777 = vpop.f32.mrf.mxu0
    %v778 = vadd.f32 %v712, %v777
    %v779 = vpop.f32.mrf.mxu0
    %v780 = vadd.f32 %v712, %v779
    %781 = vmatmul.bf16.gmra.mxu0 %v746
    %v782 = vpop.f32.mrf.mxu0
    %v783 = vadd.f32 %v712, %v782
    %v784 = vpop.f32.mrf.mxu0
    %v785 = vadd.f32 %v712, %v784
    %786 = vmatmul.bf16.gmra.mxu0 %v749
    %v787 = vpop.f32.mrf.mxu0
    %v788 = vadd.f32 %v712, %v787
    %v789 = vpop.f32.mrf.mxu0
    %v790 = vadd.f32 %v712, %v789
    %791 = vmatmul.bf16.gmra.mxu0 %v752
    %v792 = vpop.f32.mrf.mxu0
    %v793 = vadd.f32 %v712, %v792
    %v794 = vpop.f32.mrf.mxu0
    %v795 = vadd.f32 %v712, %v794
    %796 = vmatmul.bf16.gmra.mxu0 %v755
    %v797 = vpop.f32.mrf.mxu0
    %v798 = vadd.f32 %v712, %v797
    %v799 = vpop.f32.mrf.mxu0
    %v800 = vadd.f32 %v712, %v799
    %801 = vmatmul.bf16.gmra.mxu0 %v758
    %v802 = vpop.f32.mrf.mxu0
    %v803 = vadd.f32 %v712, %v802
    %v804 = vpop.f32.mrf.mxu0
    %v805 = vadd.f32 %v712, %v804
    %806 = vmatmul.bf16.gmra.mxu0 %v761
    %v807 = vpop.f32.mrf.mxu0
    %v808 = vadd.f32 %v712, %v807
    %v809 = vpop.f32.mrf.mxu0
    %v810 = vadd.f32 %v712, %v809
    %811 = vdwg.mxu0
    %v812 = vpack.c.bf16 %v773, %v773
    %v813 = vpack.c.bf16 %v775, %v775
    %v814 = vpack.c.bf16 %v778, %v778
    %v815 = vpack.c.bf16 %v780, %v780
    %v816 = vpack.c.bf16 %v783, %v783
    %v817 = vpack.c.bf16 %v785, %v785
    %v818 = vpack.c.bf16 %v788, %v788
    %v819 = vpack.c.bf16 %v790, %v790
    %v820 = vpack.c.bf16 %v793, %v793
    %v821 = vpack.c.bf16 %v795, %v795
    %v822 = vpack.c.bf16 %v798, %v798
    %v823 = vpack.c.bf16 %v800, %v800
    %v824 = vpack.c.bf16 %v803, %v803
    %v825 = vpack.c.bf16 %v805, %v805
    %v826 = vpack.c.bf16 %v808, %v808
    %v827 = vpack.c.bf16 %v810, %v810
    %828 = vst [vmem:[#allocation5] sm:$0xf] %v812
    %829 = vst [vmem:[#allocation5 + $0x4] sm:$0xf] %v813
    %830 = vst [vmem:[#allocation5 + $0x8] sm:$0xf] %v814
    %831 = vst [vmem:[#allocation5 + $0xc] sm:$0xf] %v815
    %832 = vst [vmem:[#allocation5 + $0x10] sm:$0xf] %v816
    %833 = vst [vmem:[#allocation5 + $0x14] sm:$0xf] %v817
    %834 = vst [vmem:[#allocation5 + $0x18] sm:$0xf] %v818
    %835 = vst [vmem:[#allocation5 + $0x1c] sm:$0xf] %v819
    %836 = vst [vmem:[#allocation5 + $0x20] sm:$0xf] %v820
    %837 = vst [vmem:[#allocation5 + $0x24] sm:$0xf] %v821
    %838 = vst [vmem:[#allocation5 + $0x28] sm:$0xf] %v822
    %839 = vst [vmem:[#allocation5 + $0x2c] sm:$0xf] %v823
    %840 = vst [vmem:[#allocation5 + $0x30] sm:$0xf] %v824
    %841 = vst [vmem:[#allocation5 + $0x34] sm:$0xf] %v825
    %842 = vst [vmem:[#allocation5 + $0x38] sm:$0xf] %v826
    %843 = vst [vmem:[#allocation5 + $0x3c] sm:$0xf] %v827
    // Predicated region
    $region42: #{tpu_custom_call.1} parent=1 // pred_check
      _
    $region43: #{tpu_custom_call.1} parent=1 // pred_check_branch
      %845 = sbr.rel (0) target = $region45
    $region44: #{tpu_custom_call.1} parent=1 // pred_region
      %847 = vsyncadd [#allocation4], 0
      %s848 = sshll.u32 [#allocation5], 4
      %s849 = int_to_ptr.vmem [resolvable:$true] %s848
      %s850 = sshll.u32 %s9, 4
      %s851 = int_to_ptr.hbm [resolvable:$true] %s850
      %856 = dma.vmem_to_hbm [thread:$0]  %s849, 1024, %s851, [#allocation4], 64, 64, 4
    $region45: #{tpu_custom_call.1} parent=1 // pred_fallthru
      _
    // Predicated region
    $region46: #{tpu_custom_call.1} parent=1 // pred_check
      _
    $region47: #{tpu_custom_call.1} parent=1 // pred_check_branch
      %858 = sbr.rel (0) target = $region49
    $region48: #{tpu_custom_call.1} parent=1 // pred_region
      %860 = dma.done [#allocation4], 1024
    $region49: #{tpu_custom_call.1} parent=1 // pred_fallthru
      _
    %861 = vsyncpa [#allocation3], 1
    %862 = vsyncpa [#allocation4], 1

</llo_original>
